<compile_context>
chip_gen: v7x
topology: tpu7x:2x2x1
jax: 0.10.0
libtpu: 0.0.40
codegen_flags: <defaults>
</compile_context>

<pallas_src>
import functools

import jax
import jax.numpy as jnp
from jax.experimental import pallas as pl
from jax.experimental.pallas import tpu as pltpu

LANE = 128


def _round_up(x, m):
    return (x + m - 1) // m * m


def encoder_kernel(x_ref, w1_ref, b1_ref, w2_ref, b2_ref, out_ref):
    # fc1: bf16 operands on the MXU, f32 accumulation; bias + ReLU in f32.
    h = jnp.dot(x_ref[...], w1_ref[...], preferred_element_type=jnp.float32)
    h = jnp.maximum(h + b1_ref[...], 0.0)               # (TB, H) + (1, H)
    # fc2: cast hidden activations back to bf16 for the MXU; bias + sigmoid f32.
    y = jnp.dot(h.astype(w2_ref.dtype), w2_ref[...],
                preferred_element_type=jnp.float32)
    y = y + b2_ref[...]                                  # (TB, Opad) + (1, Opad)
    out_ref[...] = jax.nn.sigmoid(y).astype(out_ref.dtype)


def prepare_encoder_params(w1, b1, w2, b2, compute_dtype=jnp.bfloat16):
    """One-time parameter prep (do NOT call per forward pass).

    - transpose torch-layout weights to (in, out) so the kernel does plain
      MXU matmuls with no in-kernel transpose,
    - zero-pad the output dim to a multiple of 128 lanes (full-width second
      GEMM, lane-dense stores),
    - cast matmul operands to bf16; biases stay f32 (elementwise math is f32).
    """
    hidden, _ = w1.shape
    out_dim = w2.shape[0]
    out_pad = _round_up(out_dim, LANE)

    w1_t = jnp.asarray(w1.T, dtype=compute_dtype)                 # (in, hidden)
    b1_r = jnp.asarray(b1, dtype=jnp.float32).reshape(1, hidden)  # (1, hidden)

    w2_t = jnp.zeros((hidden, out_pad), dtype=compute_dtype)
    w2_t = w2_t.at[:, :out_dim].set(jnp.asarray(w2.T, dtype=compute_dtype))
    b2_r = jnp.zeros((1, out_pad), dtype=jnp.float32)
    b2_r = b2_r.at[:, :out_dim].set(jnp.asarray(b2, dtype=jnp.float32))
    return w1_t, b1_r, w2_t, b2_r, out_dim


@functools.partial(jax.jit, static_argnames=("out_dim", "block_b"))
def encoder_forward(x, w1_t, b1_r, w2_t, b2_r, *, out_dim, block_b=128):
    """x: (B, in) f32. Params from prepare_encoder_params(). Returns (B, out_dim)."""
    B, in_dim = x.shape
    hidden = w1_t.shape[1]
    out_pad = w2_t.shape[1]
    compute_dtype = w1_t.dtype

    # Batch tile: multiple of 8 sublanes, capped at block_b; pad B to fit.
    tb = min(block_b, _round_up(B, 8))
    b_pad = _round_up(B, tb)

    x_c = x.astype(compute_dtype)
    if b_pad != B:
        x_c = jnp.pad(x_c, ((0, b_pad - B), (0, 0)))

    out = pl.pallas_call(
        encoder_kernel,
        out_shape=jax.ShapeDtypeStruct((b_pad, out_pad), x.dtype),
        grid=(pl.cdiv(b_pad, tb),),
        in_specs=[
            # x: one batch tile per grid step -> pipelined HBM->VMEM DMA.
            pl.BlockSpec((tb, in_dim), lambda i: (i, 0)),
            # Weights / biases: same block every step -> stay resident in VMEM.
            pl.BlockSpec((in_dim, hidden), lambda i: (0, 0)),
            pl.BlockSpec((1, hidden), lambda i: (0, 0)),
            pl.BlockSpec((hidden, out_pad), lambda i: (0, 0)),
            pl.BlockSpec((1, out_pad), lambda i: (0, 0)),
        ],
        out_specs=pl.BlockSpec((tb, out_pad), lambda i: (i, 0)),
        compiler_params=pltpu.CompilerParams(
            dimension_semantics=("parallel",)),
    )(x_c, w1_t, b1_r, w2_t, b2_r)

    return out[:B, :out_dim]


def encoder_reference(x, w1, b1, w2, b2):
    h = jnp.maximum(x @ w1.T + b1, 0.0)
    return jax.nn.sigmoid(h @ w2.T + b2)


if __name__ == "__main__":
    # Small shapes consistent with Linear -> ReLU -> Linear -> Sigmoid.
    B, input_size, hidden_size, output_size = 256, 256, 128, 64

    key = jax.random.PRNGKey(0)
    kx, kw1, kb1, kw2, kb2 = jax.random.split(key, 5)

    x = jax.random.normal(kx, (B, input_size), dtype=jnp.float32)
    # Deterministic parameter init (uniform, PyTorch-Linear-like scale).
    lim1 = 1.0 / (input_size ** 0.5)
    lim2 = 1.0 / (hidden_size ** 0.5)
    w1 = jax.random.uniform(kw1, (hidden_size, input_size), jnp.float32, -lim1, lim1)
    b1 = jax.random.uniform(kb1, (hidden_size,), jnp.float32, -lim1, lim1)
    w2 = jax.random.uniform(kw2, (output_size, hidden_size), jnp.float32, -lim2, lim2)
    b2 = jax.random.uniform(kb2, (output_size,), jnp.float32, -lim2, lim2)

    # One-time parameter preparation (transpose / pad / bf16 cast).
    w1_t, b1_r, w2_t, b2_r, out_dim = prepare_encoder_params(w1, b1, w2, b2)

    out = encoder_forward(x, w1_t, b1_r, w2_t, b2_r, out_dim=out_dim, block_b=128)
    jax.block_until_ready(out)

    ref = encoder_reference(x, w1, b1, w2, b2)
    assert out.shape == (B, output_size)
    # bf16 matmul operands (f32 accumulation) -> relaxed tolerance vs f32 ref.
    assert jnp.allclose(out, ref, atol=2e-2, rtol=0.0), float(jnp.abs(out - ref).max())

    print("KERNEL_OK")
</pallas_src>

<mosaic_0001>
module attributes {stable_mosaic.version = 11 : i64} {
  func.func @encoder_kernel(%arg0: i32, %arg1: memref<128x256xbf16, #tpu.memory_space<vmem>>, %arg2: memref<256x128xbf16, #tpu.memory_space<vmem>>, %arg3: memref<1x128xf32, #tpu.memory_space<vmem>>, %arg4: memref<128x128xbf16, #tpu.memory_space<vmem>>, %arg5: memref<1x128xf32, #tpu.memory_space<vmem>>, %arg6: memref<128x128xf32, #tpu.memory_space<vmem>>) attributes {dimension_semantics = [#tpu.dimension_semantics<parallel>], iteration_bounds = array<i64: 2>, scalar_prefetch = 0 : i64, scratch_operands = 0 : i64, tpu.core_type = #tpu.core_type<tc>, window_params = [{transform_indices = @transform_0, window_bounds = array<i64: 128, 256>}, {pipeline_mode = #tpu.pipeline_mode<synchronous>, transform_indices = @transform_1, window_bounds = array<i64: 256, 128>}, {pipeline_mode = #tpu.pipeline_mode<synchronous>, transform_indices = @transform_2, window_bounds = array<i64: 1, 128>}, {pipeline_mode = #tpu.pipeline_mode<synchronous>, transform_indices = @transform_3, window_bounds = array<i64: 128, 128>}, {pipeline_mode = #tpu.pipeline_mode<synchronous>, transform_indices = @transform_4, window_bounds = array<i64: 1, 128>}, {transform_indices = @transform_5, window_bounds = array<i64: 128, 128>}]} {
    %c0 = arith.constant 0 : index
    %c0_0 = arith.constant 0 : index
    %0 = vector.load %arg1[%c0, %c0_0] : memref<128x256xbf16, #tpu.memory_space<vmem>>, vector<128x256xbf16>
    %c0_1 = arith.constant 0 : index
    %c0_2 = arith.constant 0 : index
    %1 = vector.load %arg2[%c0_1, %c0_2] : memref<256x128xbf16, #tpu.memory_space<vmem>>, vector<256x128xbf16>
    %cst = arith.constant dense<0.000000e+00> : vector<128x128xf32>
    %2 = tpu.matmul %0, %1, %cst {dimension_numbers = #tpu.dot_dimension_numbers<[1], [0], [0], [1], [0, 0, 1, 1], [], []>} : vector<128x256xbf16>, vector<256x128xbf16>, vector<128x128xf32> -> vector<128x128xf32>
    %c0_3 = arith.constant 0 : index
    %c0_4 = arith.constant 0 : index
    %3 = vector.load %arg3[%c0_3, %c0_4] : memref<1x128xf32, #tpu.memory_space<vmem>>, vector<1x128xf32>
    %4 = vector.broadcast %3 : vector<1x128xf32> to vector<128x128xf32>
    %5 = arith.addf %2, %4 : vector<128x128xf32>
    %cst_5 = arith.constant 0.000000e+00 : f32
    %6 = vector.broadcast %cst_5 : f32 to vector<128x128xf32>
    %7 = arith.maximumf %5, %6 : vector<128x128xf32>
    %8 = arith.truncf %7 : vector<128x128xf32> to vector<128x128xbf16>
    %c0_6 = arith.constant 0 : index
    %c0_7 = arith.constant 0 : index
    %9 = vector.load %arg4[%c0_6, %c0_7] : memref<128x128xbf16, #tpu.memory_space<vmem>>, vector<128x128xbf16>
    %cst_8 = arith.constant dense<0.000000e+00> : vector<128x128xf32>
    %10 = tpu.matmul %8, %9, %cst_8 {dimension_numbers = #tpu.dot_dimension_numbers<[1], [0], [0], [1], [0, 0, 1, 1], [], []>} : vector<128x128xbf16>, vector<128x128xbf16>, vector<128x128xf32> -> vector<128x128xf32>
    %c0_9 = arith.constant 0 : index
    %c0_10 = arith.constant 0 : index
    %11 = vector.load %arg5[%c0_9, %c0_10] : memref<1x128xf32, #tpu.memory_space<vmem>>, vector<1x128xf32>
    %12 = vector.broadcast %11 : vector<1x128xf32> to vector<128x128xf32>
    %13 = arith.addf %10, %12 : vector<128x128xf32>
    %14 = arith.negf %13 : vector<128x128xf32>
    %15 = math.exp %14 : vector<128x128xf32>
    %cst_11 = arith.constant 1.000000e+00 : f32
    %16 = vector.broadcast %cst_11 : f32 to vector<128x128xf32>
    %17 = arith.addf %16, %15 : vector<128x128xf32>
    %18 = arith.divf %16, %17 : vector<128x128xf32>
    %c0_12 = arith.constant 0 : index
    %c0_13 = arith.constant 0 : index
    %19 = vector.load %arg6[%c0_12, %c0_13] : memref<128x128xf32, #tpu.memory_space<vmem>>, vector<128x128xf32>
    tpu.vector_store %arg6[%c0_12, %c0_13], %18 {strides = array<i32>} : memref<128x128xf32, #tpu.memory_space<vmem>>, vector<128x128xf32>,
    return
  }
  func.func @transform_0(%arg0: i32) -> (i32, i32) {
    %c0_i32 = arith.constant 0 : i32
    %c0_i32_0 = arith.constant 0 : i32
    return %arg0, %c0_i32 : i32, i32
  }
  func.func @transform_1(%arg0: i32) -> (i32, i32) {
    %c0_i32 = arith.constant 0 : i32
    %c0_i32_0 = arith.constant 0 : i32
    %c0_i32_1 = arith.constant 0 : i32
    return %c0_i32, %c0_i32_0 : i32, i32
  }
  func.func @transform_2(%arg0: i32) -> (i32, i32) {
    %c0_i32 = arith.constant 0 : i32
    %c0_i32_0 = arith.constant 0 : i32
    %c0_i32_1 = arith.constant 0 : i32
    return %c0_i32, %c0_i32_0 : i32, i32
  }
  func.func @transform_3(%arg0: i32) -> (i32, i32) {
    %c0_i32 = arith.constant 0 : i32
    %c0_i32_0 = arith.constant 0 : i32
    %c0_i32_1 = arith.constant 0 : i32
    return %c0_i32, %c0_i32_0 : i32, i32
  }
  func.func @transform_4(%arg0: i32) -> (i32, i32) {
    %c0_i32 = arith.constant 0 : i32
    %c0_i32_0 = arith.constant 0 : i32
    %c0_i32_1 = arith.constant 0 : i32
    return %c0_i32, %c0_i32_0 : i32, i32
  }
  func.func @transform_5(%arg0: i32) -> (i32, i32) {
    %c0_i32 = arith.constant 0 : i32
    %c0_i32_0 = arith.constant 0 : i32
    return %arg0, %c0_i32 : i32, i32
  }
}

</mosaic_0001>

<llo_original>
// kernel: encoder_forward.1
$region0: #{encoder_forward.1}
  #allocation0 [shape = 'u32[]', space=smem, size = 0x4, offset = 0x4, fixed_abs, tag = 'smem constant byte address 0x4 - core index']
  #allocation1 [shape = 'u32[144,128]{1,0:T(1,128)}', space=vmem, size = 0x12000, scoped, tag = 'internal scratch']
  %s0 = inlined_call_operand.vmem [shape: bf16[256,256], index: 0, kind: input, shape index: {}]
  %s1 = inlined_call_operand.vmem [shape: bf16[256,128], index: 1, kind: input, shape index: {}]
  %s2 = inlined_call_operand.vmem [shape: f32[1,128], index: 2, kind: input, shape index: {}]
  %s3 = inlined_call_operand.vmem [shape: bf16[128,128], index: 3, kind: input, shape index: {}]
  %s4 = inlined_call_operand.vmem [shape: f32[1,128], index: 4, kind: input, shape index: {}]
  %s5 = inlined_call_operand.vmem [shape: f32[256,128], index: 5, kind: output, shape index: {}]
  %s6 = sld [smem:[#allocation0]]
  $region53: #{encoder_forward.1} parent=0
    _
  %s8 = ssub.s32 1, %s6
  %s9 = scalar_select 0, %s8, %s6
  loop: start=0, step=1, limit=4
  $region2: #{encoder_forward.1} parent=0 // loop_pre_header
    _
  $region3: #{encoder_forward.1} parent=0 // loop_header
    %s11 = sphi 0, %s15
    %p12 = scmp.ge.s32.totalorder %s11, 4
    %s21 = sphi 0, %s23
    %s24 = sphi 0, %s21
    %s25 = sphi 0, %s24
    %s41 = sphi 0, %s25
    %s45 = sphi 0, %s45
    %s47 = sphi 0, %s45
    %s48 = sphi 0, %s47
    %s62 = sphi 0, %s48
    %s66 = sphi 0, %s66
    %s68 = sphi 0, %s66
    %s69 = sphi 0, %s68
    %s83 = sphi 0, %s69
    %s87 = sphi 0, %s87
    %s89 = sphi 0, %s87
    %s90 = sphi 0, %s89
    %s104 = sphi 0, %s90
    %s108 = sphi 0, %s108
    %s110 = sphi 0, %s108
    %s111 = sphi 0, %s110
    %s125 = sphi 0, %s111
    %s131 = sphi 0, %s133
    %s134 = sphi 0, %s131
    %s135 = sphi 0, %s134
    %s151 = sphi 0, %s135
  $region4: #{encoder_forward.1} parent=0 // loop_header_branch
    %14 = sbr.rel (%p12) target = $region8
  $region5: #{encoder_forward.1} parent=0 // loop_body
    %s16 = ssub.s32 %s11, 1
    %s17 = ssub.s32 %s11, 2
    %s18 = sadd.s32 %s11, 1
    %s19 = ssub.s32 %s11, %s18
    %p20 = scmp.eq.s32.totalorder %s19, 0
    %s22 = sadd.s32 %s21, 1
    %s23 = scalar_select %p20, %s21, %s22
    %p26 = pneg %p20
    %p27 = scmp.eq.s32.totalorder %s11, 1
    %p28 = por %p26, %p27
    %p29 = scmp.ne.s32.totalorder %s21, %s24
    %p30 = scmp.eq.s32.totalorder %s11, 0
    %p31 = por %p29, %p30
    %p32 = scmp.ne.s32.totalorder %s21, %s24
    %p33 = scmp.eq.s32.totalorder %s16, 1
    %p34 = por %p32, %p33
    %p35 = scmp.ne.s32.totalorder %s24, %s25
    %p36 = scmp.eq.s32.totalorder %s16, 0
    %p37 = por %p35, %p36
    %p38 = scmp.ne.s32.totalorder %s24, %s25
    %p39 = scmp.eq.s32.totalorder %s17, 1
    %p40 = por %p38, %p39
    %p42 = scmp.ne.s32.totalorder %s25, %s41
    %p43 = scmp.eq.s32.totalorder %s17, 0
    %p44 = por %p42, %p43
    %s46 = sadd.s32 %s45, 1
    %p49 = scmp.eq.s32.totalorder %s11, 1
    %p50 = scmp.ne.s32.totalorder %s45, %s47
    %p51 = scmp.eq.s32.totalorder %s11, 0
    %p52 = por %p50, %p51
    %p53 = scmp.ne.s32.totalorder %s45, %s47
    %p54 = scmp.eq.s32.totalorder %s16, 1
    %p55 = por %p53, %p54
    %p56 = scmp.ne.s32.totalorder %s47, %s48
    %p57 = scmp.eq.s32.totalorder %s16, 0
    %p58 = por %p56, %p57
    %p59 = scmp.ne.s32.totalorder %s47, %s48
    %p60 = scmp.eq.s32.totalorder %s17, 1
    %p61 = por %p59, %p60
    %p63 = scmp.ne.s32.totalorder %s48, %s62
    %p64 = scmp.eq.s32.totalorder %s17, 0
    %p65 = por %p63, %p64
    %s67 = sadd.s32 %s66, 1
    %p70 = scmp.eq.s32.totalorder %s11, 1
    %p71 = scmp.ne.s32.totalorder %s66, %s68
    %p72 = scmp.eq.s32.totalorder %s11, 0
    %p73 = por %p71, %p72
    %p74 = scmp.ne.s32.totalorder %s66, %s68
    %p75 = scmp.eq.s32.totalorder %s16, 1
    %p76 = por %p74, %p75
    %p77 = scmp.ne.s32.totalorder %s68, %s69
    %p78 = scmp.eq.s32.totalorder %s16, 0
    %p79 = por %p77, %p78
    %p80 = scmp.ne.s32.totalorder %s68, %s69
    %p81 = scmp.eq.s32.totalorder %s17, 1
    %p82 = por %p80, %p81
    %p84 = scmp.ne.s32.totalorder %s69, %s83
    %p85 = scmp.eq.s32.totalorder %s17, 0
    %p86 = por %p84, %p85
    %s88 = sadd.s32 %s87, 1
    %p91 = scmp.eq.s32.totalorder %s11, 1
    %p92 = scmp.ne.s32.totalorder %s87, %s89
    %p93 = scmp.eq.s32.totalorder %s11, 0
    %p94 = por %p92, %p93
    %p95 = scmp.ne.s32.totalorder %s87, %s89
    %p96 = scmp.eq.s32.totalorder %s16, 1
    %p97 = por %p95, %p96
    %p98 = scmp.ne.s32.totalorder %s89, %s90
    %p99 = scmp.eq.s32.totalorder %s16, 0
    %p100 = por %p98, %p99
    %p101 = scmp.ne.s32.totalorder %s89, %s90
    %p102 = scmp.eq.s32.totalorder %s17, 1
    %p103 = por %p101, %p102
    %p105 = scmp.ne.s32.totalorder %s90, %s104
    %p106 = scmp.eq.s32.totalorder %s17, 0
    %p107 = por %p105, %p106
    %s109 = sadd.s32 %s108, 1
    %p112 = scmp.eq.s32.totalorder %s11, 1
    %p113 = scmp.ne.s32.totalorder %s108, %s110
    %p114 = scmp.eq.s32.totalorder %s11, 0
    %p115 = por %p113, %p114
    %p116 = scmp.ne.s32.totalorder %s108, %s110
    %p117 = scmp.eq.s32.totalorder %s16, 1
    %p118 = por %p116, %p117
    %p119 = scmp.ne.s32.totalorder %s110, %s111
    %p120 = scmp.eq.s32.totalorder %s16, 0
    %p121 = por %p119, %p120
    %p122 = scmp.ne.s32.totalorder %s110, %s111
    %p123 = scmp.eq.s32.totalorder %s17, 1
    %p124 = por %p122, %p123
    %p126 = scmp.ne.s32.totalorder %s111, %s125
    %p127 = scmp.eq.s32.totalorder %s17, 0
    %p128 = por %p126, %p127
    %s129 = ssub.s32 %s11, %s18
    %p130 = scmp.eq.s32.totalorder %s129, 0
    %s132 = sadd.s32 %s131, 1
    %s133 = scalar_select %p130, %s131, %s132
    %p136 = pneg %p130
    %p137 = scmp.eq.s32.totalorder %s11, 1
    %p138 = por %p136, %p137
    %p139 = scmp.ne.s32.totalorder %s131, %s134
    %p140 = scmp.eq.s32.totalorder %s11, 0
    %p141 = por %p139, %p140
    %p142 = scmp.ne.s32.totalorder %s131, %s134
    %p143 = scmp.eq.s32.totalorder %s16, 1
    %p144 = por %p142, %p143
    %p145 = scmp.ne.s32.totalorder %s134, %s135
    %p146 = scmp.eq.s32.totalorder %s16, 0
    %p147 = por %p145, %p146
    %p148 = scmp.ne.s32.totalorder %s134, %s135
    %p149 = scmp.eq.s32.totalorder %s17, 1
    %p150 = por %p148, %p149
    %p152 = scmp.ne.s32.totalorder %s135, %s151
    %p153 = scmp.eq.s32.totalorder %s17, 0
    %p154 = por %p152, %p153
    %p155 = scmp.le.s32.totalorder 1, %s11
    %p156 = scmp.lt.s32.totalorder %s11, 3
    %p157 = pnand %p155, %p156
    %p158 = pneg %p157
    // Predicated region
    $region9: #{encoder_forward.1} parent=5 // pred_check
      _
    $region10: #{encoder_forward.1} parent=5 // pred_check_branch
      %160 = sbr.rel (%p157) target = $region12
    $region11: #{encoder_forward.1} parent=5 // pred_region
      %s161 = ssub.s32 %s11, 1
      // Predicated region
      $region13: #{encoder_forward.1} parent=11 // pred_check
        %p162 = pneg %p58
      $region14: #{encoder_forward.1} parent=11 // pred_check_branch
        %164 = sbr.rel (%p162) target = $region16
      $region15: #{encoder_forward.1} parent=11 // pred_region
        _
      $region16: #{encoder_forward.1} parent=11 // pred_fallthru
        _
      // Predicated region
      $region17: #{encoder_forward.1} parent=11 // pred_check
        %p165 = pneg %p79
      $region18: #{encoder_forward.1} parent=11 // pred_check_branch
        %167 = sbr.rel (%p165) target = $region20
      $region19: #{encoder_forward.1} parent=11 // pred_region
        _
      $region20: #{encoder_forward.1} parent=11 // pred_fallthru
        _
      // Predicated region
      $region21: #{encoder_forward.1} parent=11 // pred_check
        %p168 = pneg %p100
      $region22: #{encoder_forward.1} parent=11 // pred_check_branch
        %170 = sbr.rel (%p168) target = $region24
      $region23: #{encoder_forward.1} parent=11 // pred_region
        _
      $region24: #{encoder_forward.1} parent=11 // pred_fallthru
        _
      // Predicated region
      $region25: #{encoder_forward.1} parent=11 // pred_check
        %p171 = pneg %p121
      $region26: #{encoder_forward.1} parent=11 // pred_check_branch
        %173 = sbr.rel (%p171) target = $region28
      $region27: #{encoder_forward.1} parent=11 // pred_region
        _
      $region28: #{encoder_forward.1} parent=11 // pred_fallthru
        _
    $region12: #{encoder_forward.1} parent=5 // pred_fallthru
      _
    %p174 = scmp.lt.s32.totalorder %s11, 2
    // Predicated region
    $region29: #{encoder_forward.1} parent=5 // pred_check
      %p175 = pneg %p174
    $region30: #{encoder_forward.1} parent=5 // pred_check_branch
      %177 = sbr.rel (%p175) target = $region32
    $region31: #{encoder_forward.1} parent=5 // pred_region
      // Predicated region
      $region33: #{encoder_forward.1} parent=31 // pred_check
        %p178 = pneg %p31
      $region34: #{encoder_forward.1} parent=31 // pred_check_branch
        %180 = sbr.rel (%p178) target = $region36
      $region35: #{encoder_forward.1} parent=31 // pred_region
        %s181 = smul.u32 16, %s11
        %p182 = scmp.lt.s32.totalorder %s181, 31
        %s183 = scalar_select %p182, %s181, 31
        %s184 = smul.addr %s183, 2
        %s185 = smul.addr %s184, 4
        %s186 = scalar_lea.vmem %s0, %s185
        %s187 = smul.u32 16, %s11
      $region36: #{encoder_forward.1} parent=31 // pred_fallthru
        _
    $region32: #{encoder_forward.1} parent=5 // pred_fallthru
      _
    %p188 = scmp.le.s32.totalorder 1, %s11
    %p189 = scmp.lt.s32.totalorder %s11, 3
    %p190 = pnand %p188, %p189
    %p191 = pneg %p190
    // Predicated region
    $region37: #{encoder_forward.1} parent=5 // pred_check
      _
    $region38: #{encoder_forward.1} parent=5 // pred_check_branch
      %193 = sbr.rel (%p190) target = $region40
    $region39: #{encoder_forward.1} parent=5 // pred_region
      %s194 = ssub.s32 %s11, 1
      %s195 = smul.u32 16, %s16
      %p196 = scmp.lt.s32.totalorder %s195, 31
      %s197 = scalar_select %p196, %s195, 31
      %s198 = smul.addr %s197, 2
      %s199 = smul.addr %s198, 4
      %s200 = scalar_lea.vmem %s0, %s199
      %p201 = pneg %p37
      %p202 = pneg %p34
      %p203 = pneg %p58
      %p204 = pneg %p55
      %p205 = pneg %p79
      %p206 = pneg %p76
      %p207 = pneg %p100
      %p208 = pneg %p97
      %p209 = pneg %p121
      %p210 = pneg %p118
      %p211 = pneg %p147
      %p212 = pneg %p144
      %s213 = smul.u32 16, %s16
      %p214 = scmp.lt.s32.totalorder %s213, 31
      %s215 = scalar_select %p214, %s213, 31
      %s216 = smul.addr %s215, 8
      %s217 = scalar_lea.vmem %s5, %s216
      %s218 = smul.u32 16, %s16
      %p219 = scmp.lt.s32.totalorder %s218, 31
      %s220 = scalar_select %p219, %s218, 31
      %s221 = smul.addr %s220, 2
      %s222 = smul.addr %s221, 4
      %s223 = scalar_lea.vmem %s0, %s222
      %s224 = smul.u32 16, %s16
      %s225 = smul.u32 16, %s16
      %p226 = scmp.lt.s32.totalorder %s225, 31
      %s227 = scalar_select %p226, %s225, 31
      %s228 = smul.addr %s227, 8
      %s229 = scalar_lea.vmem %s5, %s228
      %s230 = smul.u32 16, %s16
      %v232 = vld [vmem:[%s223] sm:$0xff]
      %v233 = vld [vmem:[%s223 + $0x8] sm:$0xff]
      %v234 = vld [vmem:[%s223 + $0x10] sm:$0xff]
      %v235 = vld [vmem:[%s223 + $0x18] sm:$0xff]
      %v236 = vld [vmem:[%s223 + $0x20] sm:$0xff]
      %v237 = vld [vmem:[%s223 + $0x28] sm:$0xff]
      %v238 = vld [vmem:[%s223 + $0x30] sm:$0xff]
      %v239 = vld [vmem:[%s223 + $0x38] sm:$0xff]
      %v240 = vld [vmem:[%s223 + $0x40] sm:$0xff]
      %v241 = vld [vmem:[%s223 + $0x48] sm:$0xff]
      %v242 = vld [vmem:[%s223 + $0x50] sm:$0xff]
      %v243 = vld [vmem:[%s223 + $0x58] sm:$0xff]
      %v244 = vld [vmem:[%s223 + $0x60] sm:$0xff]
      %v245 = vld [vmem:[%s223 + $0x68] sm:$0xff]
      %v246 = vld [vmem:[%s223 + $0x70] sm:$0xff]
      %v247 = vld [vmem:[%s223 + $0x78] sm:$0xff]
      %v248 = vld [vmem:[%s1] sm:$0xf]
      %v249 = vld [vmem:[%s1 + $0x4] sm:$0xf]
      %v250 = vld [vmem:[%s1 + $0x8] sm:$0xf]
      %v251 = vld [vmem:[%s1 + $0xc] sm:$0xf]
      %v252 = vld [vmem:[%s1 + $0x10] sm:$0xf]
      %v253 = vld [vmem:[%s1 + $0x14] sm:$0xf]
      %v254 = vld [vmem:[%s1 + $0x18] sm:$0xf]
      %v255 = vld [vmem:[%s1 + $0x1c] sm:$0xf]
      %v256 = vld [vmem:[%s1 + $0x20] sm:$0xf]
      %v257 = vld [vmem:[%s1 + $0x24] sm:$0xf]
      %v258 = vld [vmem:[%s1 + $0x28] sm:$0xf]
      %v259 = vld [vmem:[%s1 + $0x2c] sm:$0xf]
      %v260 = vld [vmem:[%s1 + $0x30] sm:$0xf]
      %v261 = vld [vmem:[%s1 + $0x34] sm:$0xf]
      %v262 = vld [vmem:[%s1 + $0x38] sm:$0xf]
      %v263 = vld [vmem:[%s1 + $0x3c] sm:$0xf]
      %v264 = vld [vmem:[%s1 + $0x40] sm:$0xf]
      %v265 = vld [vmem:[%s1 + $0x44] sm:$0xf]
      %v266 = vld [vmem:[%s1 + $0x48] sm:$0xf]
      %v267 = vld [vmem:[%s1 + $0x4c] sm:$0xf]
      %v268 = vld [vmem:[%s1 + $0x50] sm:$0xf]
      %v269 = vld [vmem:[%s1 + $0x54] sm:$0xf]
      %v270 = vld [vmem:[%s1 + $0x58] sm:$0xf]
      %v271 = vld [vmem:[%s1 + $0x5c] sm:$0xf]
      %v272 = vld [vmem:[%s1 + $0x60] sm:$0xf]
      %v273 = vld [vmem:[%s1 + $0x64] sm:$0xf]
      %v274 = vld [vmem:[%s1 + $0x68] sm:$0xf]
      %v275 = vld [vmem:[%s1 + $0x6c] sm:$0xf]
      %v276 = vld [vmem:[%s1 + $0x70] sm:$0xf]
      %v277 = vld [vmem:[%s1 + $0x74] sm:$0xf]
      %v278 = vld [vmem:[%s1 + $0x78] sm:$0xf]
      %v279 = vld [vmem:[%s1 + $0x7c] sm:$0xf]
      %v280 = vld [vmem:[%s2] sm:$0x1]
      %v282 = vlaneseq
      %v283 = vshrl.u32 %v282, 7
      %v284 = vsub.s32 0, %v283
      %v285 = vrot.slane %v280, %v284
      %v303 = vunpack.c.l.b16 %v232
      %v304 = vunpack.c.h.b16 %v232
      %v305 = vunpack.c.l.b16 %v233
      %v306 = vunpack.c.h.b16 %v233
      %v307 = vunpack.c.l.b16 %v234
      %v308 = vunpack.c.h.b16 %v234
      %v309 = vunpack.c.l.b16 %v235
      %v310 = vunpack.c.h.b16 %v235
      %v311 = vunpack.c.l.b16 %v236
      %v312 = vunpack.c.h.b16 %v236
      %v313 = vunpack.c.l.b16 %v237
      %v314 = vunpack.c.h.b16 %v237
      %v315 = vunpack.c.l.b16 %v238
      %v316 = vunpack.c.h.b16 %v238
      %v317 = vunpack.c.l.b16 %v239
      %v318 = vunpack.c.h.b16 %v239
      %v319 = vunpack.c.l.b16 %v240
      %v320 = vunpack.c.h.b16 %v240
      %v321 = vunpack.c.l.b16 %v241
      %v322 = vunpack.c.h.b16 %v241
      %v323 = vunpack.c.l.b16 %v242
      %v324 = vunpack.c.h.b16 %v242
      %v325 = vunpack.c.l.b16 %v243
      %v326 = vunpack.c.h.b16 %v243
      %v327 = vunpack.c.l.b16 %v244
      %v328 = vunpack.c.h.b16 %v244
      %v329 = vunpack.c.l.b16 %v245
      %v330 = vunpack.c.h.b16 %v245
      %v331 = vunpack.c.l.b16 %v246
      %v332 = vunpack.c.h.b16 %v246
      %v333 = vunpack.c.l.b16 %v247
      %v334 = vunpack.c.h.b16 %v247
      %v335 = vpack.c.b16 %v305, %v303
      %v336 = vpack.c.b16 %v306, %v304
      %v337 = vpack.c.b16 %v309, %v307
      %v338 = vpack.c.b16 %v310, %v308
      %v339 = vpack.c.b16 %v313, %v311
      %v340 = vpack.c.b16 %v314, %v312
      %v341 = vpack.c.b16 %v317, %v315
      %v342 = vpack.c.b16 %v318, %v316
      %v343 = vpack.c.b16 %v321, %v319
      %v344 = vpack.c.b16 %v322, %v320
      %v345 = vpack.c.b16 %v325, %v323
      %v346 = vpack.c.b16 %v326, %v324
      %v347 = vpack.c.b16 %v329, %v327
      %v348 = vpack.c.b16 %v330, %v328
      %v349 = vpack.c.b16 %v333, %v331
      %v350 = vpack.c.b16 %v334, %v332
      %v399 = vunpack.c.l.b16 %v248
      %v400 = vunpack.c.l.b16 %v249
      %v401 = vunpack.c.l.b16 %v250
      %v402 = vunpack.c.l.b16 %v251
      %v403 = vunpack.c.l.b16 %v252
      %v404 = vunpack.c.l.b16 %v253
      %v405 = vunpack.c.l.b16 %v254
      %v406 = vunpack.c.l.b16 %v255
      %v407 = vunpack.c.l.b16 %v256
      %v408 = vunpack.c.l.b16 %v257
      %v409 = vunpack.c.l.b16 %v258
      %v410 = vunpack.c.l.b16 %v259
      %v411 = vunpack.c.l.b16 %v260
      %v412 = vunpack.c.l.b16 %v261
      %v413 = vunpack.c.l.b16 %v262
      %v414 = vunpack.c.l.b16 %v263
      %v415 = vunpack.c.l.b16 %v264
      %v416 = vunpack.c.l.b16 %v265
      %v417 = vunpack.c.l.b16 %v266
      %v418 = vunpack.c.l.b16 %v267
      %v419 = vunpack.c.l.b16 %v268
      %v420 = vunpack.c.l.b16 %v269
      %v421 = vunpack.c.l.b16 %v270
      %v422 = vunpack.c.l.b16 %v271
      %v423 = vunpack.c.l.b16 %v272
      %v424 = vunpack.c.l.b16 %v273
      %v425 = vunpack.c.l.b16 %v274
      %v426 = vunpack.c.l.b16 %v275
      %v427 = vunpack.c.l.b16 %v276
      %v428 = vunpack.c.l.b16 %v277
      %v429 = vunpack.c.l.b16 %v278
      %v430 = vunpack.c.l.b16 %v279
      %v431 = vpack.c.b16 %v400, %v399
      %v432 = vpack.c.b16 %v402, %v401
      %v433 = vpack.c.b16 %v404, %v403
      %v434 = vpack.c.b16 %v406, %v405
      %v435 = vpack.c.b16 %v408, %v407
      %v436 = vpack.c.b16 %v410, %v409
      %v437 = vpack.c.b16 %v412, %v411
      %v438 = vpack.c.b16 %v414, %v413
      %v439 = vpack.c.b16 %v416, %v415
      %v440 = vpack.c.b16 %v418, %v417
      %v441 = vpack.c.b16 %v420, %v419
      %v442 = vpack.c.b16 %v422, %v421
      %v443 = vpack.c.b16 %v424, %v423
      %v444 = vpack.c.b16 %v426, %v425
      %v445 = vpack.c.b16 %v428, %v427
      %v446 = vpack.c.b16 %v430, %v429
      %463 = vmatprep.subr.bf16.mxu0 0
      %464 = vmatpush1.bf16.msra.mxu0 %v431
      %465 = vmatprep.subr.bf16.mxu0 0
      %466 = vmatpush1.bf16.msra.mxu0 %v432
      %467 = vmatprep.subr.bf16.mxu0 0
      %468 = vmatpush1.bf16.msra.mxu0 %v433
      %469 = vmatprep.subr.bf16.mxu0 0
      %470 = vmatpush1.bf16.msra.mxu0 %v434
      %471 = vmatprep.subr.bf16.mxu0 0
      %472 = vmatpush1.bf16.msra.mxu0 %v435
      %473 = vmatprep.subr.bf16.mxu0 0
      %474 = vmatpush1.bf16.msra.mxu0 %v436
      %475 = vmatprep.subr.bf16.mxu0 0
      %476 = vmatpush1.bf16.msra.mxu0 %v437
      %477 = vmatprep.subr.bf16.mxu0 0
      %478 = vmatpush1.bf16.msra.mxu0 %v438
      %479 = vmatprep.subr.bf16.mxu0 0
      %480 = vmatpush1.bf16.msra.mxu0 %v439
      %481 = vmatprep.subr.bf16.mxu0 0
      %482 = vmatpush1.bf16.msra.mxu0 %v440
      %483 = vmatprep.subr.bf16.mxu0 0
      %484 = vmatpush1.bf16.msra.mxu0 %v441
      %485 = vmatprep.subr.bf16.mxu0 0
      %486 = vmatpush1.bf16.msra.mxu0 %v442
      %487 = vmatprep.subr.bf16.mxu0 0
      %488 = vmatpush1.bf16.msra.mxu0 %v443
      %489 = vmatprep.subr.bf16.mxu0 0
      %490 = vmatpush1.bf16.msra.mxu0 %v444
      %491 = vmatprep.subr.bf16.mxu0 0
      %492 = vmatpush1.bf16.msra.mxu0 %v445
      %493 = vmatprep.subr.bf16.mxu0 0
      %494 = vmatpush1.bf16.msra.mxu0 %v446
      %495 = vmatprep.mubr.bf16.mxu0 %v336
      %496 = vmatmul.mubr.bf16.gmra.mrb[0].mxu0 %v335
      %v497 = vpop.f32.mrb[0].mxu0
      %v498 = vadd.f32 %v285, %v497
      %v499 = vpop.f32.mrb[0].mxu0
      %v500 = vpop.f32.mrb[0].mxu0
      %v501 = vadd.f32 %v285, %v500
      %v502 = vpop.f32.mrb[0].mxu0
      %503 = vmatprep.mubr.bf16.mxu0 %v338
      %504 = vmatmul.mubr.bf16.gmra.mrb[0].mxu0 %v337
      %v505 = vpop.f32.mrb[0].mxu0
      %v506 = vadd.f32 %v285, %v505
      %v507 = vpop.f32.mrb[0].mxu0
      %v508 = vpop.f32.mrb[0].mxu0
      %v509 = vadd.f32 %v285, %v508
      %v510 = vpop.f32.mrb[0].mxu0
      %511 = vmatprep.mubr.bf16.mxu0 %v340
      %512 = vmatmul.mubr.bf16.gmra.mrb[0].mxu0 %v339
      %v513 = vpop.f32.mrb[0].mxu0
      %v514 = vadd.f32 %v285, %v513
      %v515 = vpop.f32.mrb[0].mxu0
      %v516 = vpop.f32.mrb[0].mxu0
      %v517 = vadd.f32 %v285, %v516
      %v518 = vpop.f32.mrb[0].mxu0
      %519 = vmatprep.mubr.bf16.mxu0 %v342
      %520 = vmatmul.mubr.bf16.gmra.mrb[0].mxu0 %v341
      %v521 = vpop.f32.mrb[0].mxu0
      %v522 = vadd.f32 %v285, %v521
      %v523 = vpop.f32.mrb[0].mxu0
      %v524 = vpop.f32.mrb[0].mxu0
      %v525 = vadd.f32 %v285, %v524
      %v526 = vpop.f32.mrb[0].mxu0
      %527 = vmatprep.mubr.bf16.mxu0 %v344
      %528 = vmatmul.mubr.bf16.gmra.mrb[0].mxu0 %v343
      %v529 = vpop.f32.mrb[0].mxu0
      %v530 = vadd.f32 %v285, %v529
      %v531 = vpop.f32.mrb[0].mxu0
      %v532 = vpop.f32.mrb[0].mxu0
      %v533 = vadd.f32 %v285, %v532
      %v534 = vpop.f32.mrb[0].mxu0
      %535 = vmatprep.mubr.bf16.mxu0 %v346
      %536 = vmatmul.mubr.bf16.gmra.mrb[0].mxu0 %v345
      %v537 = vpop.f32.mrb[0].mxu0
      %v538 = vadd.f32 %v285, %v537
      %v539 = vpop.f32.mrb[0].mxu0
      %v540 = vpop.f32.mrb[0].mxu0
      %v541 = vadd.f32 %v285, %v540
      %v542 = vpop.f32.mrb[0].mxu0
      %543 = vmatprep.mubr.bf16.mxu0 %v348
      %544 = vmatmul.mubr.bf16.gmra.mrb[0].mxu0 %v347
      %v545 = vpop.f32.mrb[0].mxu0
      %v546 = vadd.f32 %v285, %v545
      %v547 = vpop.f32.mrb[0].mxu0
      %v548 = vpop.f32.mrb[0].mxu0
      %v549 = vadd.f32 %v285, %v548
      %v550 = vpop.f32.mrb[0].mxu0
      %551 = vmatprep.mubr.bf16.mxu0 %v350
      %552 = vmatmul.mubr.bf16.gmra.mrb[0].mxu0 %v349
      %v553 = vpop.f32.mrb[0].mxu0
      %v554 = vadd.f32 %v285, %v553
      %v555 = vpop.f32.mrb[0].mxu0
      %v556 = vpop.f32.mrb[0].mxu0
      %v557 = vadd.f32 %v285, %v556
      %v558 = vpop.f32.mrb[0].mxu0
      %559 = vdwg.mxu0
      %v560 = vmax.f32 %v498, 0.0
      %v561 = vmax.f32 %v501, 0.0
      %v562 = vmax.f32 %v506, 0.0
      %v563 = vmax.f32 %v509, 0.0
      %v564 = vmax.f32 %v514, 0.0
      %v565 = vmax.f32 %v517, 0.0
      %v566 = vmax.f32 %v522, 0.0
      %v567 = vmax.f32 %v525, 0.0
      %v568 = vmax.f32 %v530, 0.0
      %v569 = vmax.f32 %v533, 0.0
      %v570 = vmax.f32 %v538, 0.0
      %v571 = vmax.f32 %v541, 0.0
      %v572 = vmax.f32 %v546, 0.0
      %v573 = vmax.f32 %v549, 0.0
      %v574 = vmax.f32 %v554, 0.0
      %v575 = vmax.f32 %v557, 0.0
      %v576 = vpack.c.bf16 %v561, %v560
      %v577 = vpack.c.bf16 %v563, %v562
      %v578 = vpack.c.bf16 %v565, %v564
      %v579 = vpack.c.bf16 %v567, %v566
      %v580 = vpack.c.bf16 %v569, %v568
      %v581 = vpack.c.bf16 %v571, %v570
      %v582 = vpack.c.bf16 %v573, %v572
      %v583 = vpack.c.bf16 %v575, %v574
      %v584 = vld [vmem:[%s3] sm:$0xf]
      %v585 = vld [vmem:[%s3 + $0x4] sm:$0xf]
      %v586 = vld [vmem:[%s3 + $0x8] sm:$0xf]
      %v587 = vld [vmem:[%s3 + $0xc] sm:$0xf]
      %v588 = vld [vmem:[%s3 + $0x10] sm:$0xf]
      %v589 = vld [vmem:[%s3 + $0x14] sm:$0xf]
      %v590 = vld [vmem:[%s3 + $0x18] sm:$0xf]
      %v591 = vld [vmem:[%s3 + $0x1c] sm:$0xf]
      %v592 = vld [vmem:[%s3 + $0x20] sm:$0xf]
      %v593 = vld [vmem:[%s3 + $0x24] sm:$0xf]
      %v594 = vld [vmem:[%s3 + $0x28] sm:$0xf]
      %v595 = vld [vmem:[%s3 + $0x2c] sm:$0xf]
      %v596 = vld [vmem:[%s3 + $0x30] sm:$0xf]
      %v597 = vld [vmem:[%s3 + $0x34] sm:$0xf]
      %v598 = vld [vmem:[%s3 + $0x38] sm:$0xf]
      %v599 = vld [vmem:[%s3 + $0x3c] sm:$0xf]
      %v600 = vld [vmem:[%s4] sm:$0x1]
      %v602 = vlaneseq
      %v603 = vshrl.u32 %v602, 7
      %v604 = vsub.s32 0, %v603
      %v605 = vrot.slane %v600, %v604
      %v623 = vunpack.c.l.b16 %v584
      %v624 = vunpack.c.l.b16 %v585
      %v625 = vunpack.c.l.b16 %v586
      %v626 = vunpack.c.l.b16 %v587
      %v627 = vunpack.c.l.b16 %v588
      %v628 = vunpack.c.l.b16 %v589
      %v629 = vunpack.c.l.b16 %v590
      %v630 = vunpack.c.l.b16 %v591
      %v631 = vunpack.c.l.b16 %v592
      %v632 = vunpack.c.l.b16 %v593
      %v633 = vunpack.c.l.b16 %v594
      %v634 = vunpack.c.l.b16 %v595
      %v635 = vunpack.c.l.b16 %v596
      %v636 = vunpack.c.l.b16 %v597
      %v637 = vunpack.c.l.b16 %v598
      %v638 = vunpack.c.l.b16 %v599
      %v639 = vpack.c.b16 %v624, %v623
      %v640 = vpack.c.b16 %v626, %v625
      %v641 = vpack.c.b16 %v628, %v627
      %v642 = vpack.c.b16 %v630, %v629
      %v643 = vpack.c.b16 %v632, %v631
      %v644 = vpack.c.b16 %v634, %v633
      %v645 = vpack.c.b16 %v636, %v635
      %v646 = vpack.c.b16 %v638, %v637
      %655 = vmatprep.subr.bf16.mxu0 0
      %656 = vmatpush1.bf16.msra.mxu0 %v639
      %657 = vmatprep.subr.bf16.mxu0 0
      %658 = vmatpush1.bf16.msra.mxu0 %v640
      %659 = vmatprep.subr.bf16.mxu0 0
      %660 = vmatpush1.bf16.msra.mxu0 %v641
      %661 = vmatprep.subr.bf16.mxu0 0
      %662 = vmatpush1.bf16.msra.mxu0 %v642
      %663 = vmatprep.subr.bf16.mxu0 0
      %664 = vmatpush1.bf16.msra.mxu0 %v643
      %665 = vmatprep.subr.bf16.mxu0 0
      %666 = vmatpush1.bf16.msra.mxu0 %v644
      %667 = vmatprep.subr.bf16.mxu0 0
      %668 = vmatpush1.bf16.msra.mxu0 %v645
      %669 = vmatprep.subr.bf16.mxu0 0
      %670 = vmatpush1.bf16.msra.mxu0 %v646
      %671 = vmatprep.subr.bf16.mxu0 0
      %672 = vmatpush1.bf16.msra.mxu0 0
      %673 = vmatprep.subr.bf16.mxu0 0
      %674 = vmatpush1.bf16.msra.mxu0 0
      %675 = vmatprep.subr.bf16.mxu0 0
      %676 = vmatpush1.bf16.msra.mxu0 0
      %677 = vmatprep.subr.bf16.mxu0 0
      %678 = vmatpush1.bf16.msra.mxu0 0
      %679 = vmatprep.subr.bf16.mxu0 0
      %680 = vmatpush1.bf16.msra.mxu0 0
      %681 = vmatprep.subr.bf16.mxu0 0
      %682 = vmatpush1.bf16.msra.mxu0 0
      %683 = vmatprep.subr.bf16.mxu0 0
      %684 = vmatpush1.bf16.msra.mxu0 0
      %685 = vmatprep.subr.bf16.mxu0 0
      %686 = vmatpush1.bf16.msra.mxu0 0
      %687 = vmatprep.mubr.bf16.mxu0 0
      %688 = vmatmul.mubr.bf16.gmra.mrb[0].mxu0 %v576
      %v689 = vpop.f32.mrb[0].mxu0
      %v690 = vadd.f32 %v605, %v689
      %v691 = vpop.f32.mrb[0].mxu0
      %v692 = vpop.f32.mrb[0].mxu0
      %v693 = vadd.f32 %v605, %v692
      %v694 = vpop.f32.mrb[0].mxu0
      %695 = vmatprep.mubr.bf16.mxu0 0
      %696 = vmatmul.mubr.bf16.gmra.mrb[0].mxu0 %v577
      %v697 = vpop.f32.mrb[0].mxu0
      %v698 = vadd.f32 %v605, %v697
      %v699 = vpop.f32.mrb[0].mxu0
      %v700 = vpop.f32.mrb[0].mxu0
      %v701 = vadd.f32 %v605, %v700
      %v702 = vpop.f32.mrb[0].mxu0
      %703 = vmatprep.mubr.bf16.mxu0 0
      %704 = vmatmul.mubr.bf16.gmra.mrb[0].mxu0 %v578
      %v705 = vpop.f32.mrb[0].mxu0
      %v706 = vadd.f32 %v605, %v705
      %v707 = vpop.f32.mrb[0].mxu0
      %v708 = vpop.f32.mrb[0].mxu0
      %v709 = vadd.f32 %v605, %v708
      %v710 = vpop.f32.mrb[0].mxu0
      %711 = vmatprep.mubr.bf16.mxu0 0
      %712 = vmatmul.mubr.bf16.gmra.mrb[0].mxu0 %v579
      %v713 = vpop.f32.mrb[0].mxu0
      %v714 = vadd.f32 %v605, %v713
      %v715 = vpop.f32.mrb[0].mxu0
      %v716 = vpop.f32.mrb[0].mxu0
      %v717 = vadd.f32 %v605, %v716
      %v718 = vpop.f32.mrb[0].mxu0
      %719 = vmatprep.mubr.bf16.mxu0 0
      %720 = vmatmul.mubr.bf16.gmra.mrb[0].mxu0 %v580
      %v721 = vpop.f32.mrb[0].mxu0
      %v722 = vadd.f32 %v605, %v721
      %v723 = vpop.f32.mrb[0].mxu0
      %v724 = vpop.f32.mrb[0].mxu0
      %v725 = vadd.f32 %v605, %v724
      %v726 = vpop.f32.mrb[0].mxu0
      %727 = vmatprep.mubr.bf16.mxu0 0
      %728 = vmatmul.mubr.bf16.gmra.mrb[0].mxu0 %v581
      %v729 = vpop.f32.mrb[0].mxu0
      %v730 = vadd.f32 %v605, %v729
      %v731 = vpop.f32.mrb[0].mxu0
      %v732 = vpop.f32.mrb[0].mxu0
      %v733 = vadd.f32 %v605, %v732
      %v734 = vpop.f32.mrb[0].mxu0
      %735 = vmatprep.mubr.bf16.mxu0 0
      %736 = vmatmul.mubr.bf16.gmra.mrb[0].mxu0 %v582
      %v737 = vpop.f32.mrb[0].mxu0
      %v738 = vadd.f32 %v605, %v737
      %v739 = vpop.f32.mrb[0].mxu0
      %v740 = vpop.f32.mrb[0].mxu0
      %v741 = vadd.f32 %v605, %v740
      %v742 = vpop.f32.mrb[0].mxu0
      %743 = vmatprep.mubr.bf16.mxu0 0
      %744 = vmatmul.mubr.bf16.gmra.mrb[0].mxu0 %v583
      %v745 = vpop.f32.mrb[0].mxu0
      %v746 = vadd.f32 %v605, %v745
      %v747 = vpop.f32.mrb[0].mxu0
      %v748 = vpop.f32.mrb[0].mxu0
      %v749 = vadd.f32 %v605, %v748
      %v750 = vpop.f32.mrb[0].mxu0
      %751 = vdwg.mxu0
      %v752 = vxor.u32 %v690, 2147483648
      %v753 = vxor.u32 %v693, 2147483648
      %v754 = vxor.u32 %v698, 2147483648
      %v755 = vxor.u32 %v701, 2147483648
      %v756 = vxor.u32 %v706, 2147483648
      %v757 = vxor.u32 %v709, 2147483648
      %v758 = vxor.u32 %v714, 2147483648
      %v759 = vxor.u32 %v717, 2147483648
      %v760 = vxor.u32 %v722, 2147483648
      %v761 = vxor.u32 %v725, 2147483648
      %v762 = vxor.u32 %v730, 2147483648
      %v763 = vxor.u32 %v733, 2147483648
      %v764 = vxor.u32 %v738, 2147483648
      %v765 = vxor.u32 %v741, 2147483648
      %v766 = vxor.u32 %v746, 2147483648
      %v767 = vxor.u32 %v749, 2147483648
      %v768 = vmul.f32 %v752, 1.442695
      %v769 = vpow.pop %v768
      %v770 = vmul.f32 %v753, 1.442695
      %v771 = vpow.pop %v770
      %v772 = vmul.f32 %v754, 1.442695
      %v773 = vpow.pop %v772
      %v774 = vmul.f32 %v755, 1.442695
      %v775 = vpow.pop %v774
      %v776 = vmul.f32 %v756, 1.442695
      %v777 = vpow.pop %v776
      %v778 = vmul.f32 %v757, 1.442695
      %v779 = vpow.pop %v778
      %v780 = vmul.f32 %v758, 1.442695
      %v781 = vpow.pop %v780
      %v782 = vmul.f32 %v759, 1.442695
      %v783 = vpow.pop %v782
      %v784 = vmul.f32 %v760, 1.442695
      %v785 = vpow.pop %v784
      %v786 = vmul.f32 %v761, 1.442695
      %v787 = vpow.pop %v786
      %v788 = vmul.f32 %v762, 1.442695
      %v789 = vpow.pop %v788
      %v790 = vmul.f32 %v763, 1.442695
      %v791 = vpow.pop %v790
      %v792 = vmul.f32 %v764, 1.442695
      %v793 = vpow.pop %v792
      %v794 = vmul.f32 %v765, 1.442695
      %v795 = vpow.pop %v794
      %v796 = vmul.f32 %v766, 1.442695
      %v797 = vpow.pop %v796
      %v798 = vmul.f32 %v767, 1.442695
      %v799 = vpow.pop %v798
      %v800 = vadd.f32 %v769, 1.0
      %v801 = vadd.f32 %v771, 1.0
      %v802 = vadd.f32 %v773, 1.0
      %v803 = vadd.f32 %v775, 1.0
      %v804 = vadd.f32 %v777, 1.0
      %v805 = vadd.f32 %v779, 1.0
      %v806 = vadd.f32 %v781, 1.0
      %v807 = vadd.f32 %v783, 1.0
      %v808 = vadd.f32 %v785, 1.0
      %v809 = vadd.f32 %v787, 1.0
      %v810 = vadd.f32 %v789, 1.0
      %v811 = vadd.f32 %v791, 1.0
      %v812 = vadd.f32 %v793, 1.0
      %v813 = vadd.f32 %v795, 1.0
      %v814 = vadd.f32 %v797, 1.0
      %v815 = vadd.f32 %v799, 1.0
      %v816 = vrcp.pop %v800
      %v817 = vmul.f32 1.0, %v816
      %v818 = vrcp.pop %v801
      %v819 = vmul.f32 1.0, %v818
      %v820 = vrcp.pop %v802
      %v821 = vmul.f32 1.0, %v820
      %v822 = vrcp.pop %v803
      %v823 = vmul.f32 1.0, %v822
      %v824 = vrcp.pop %v804
      %v825 = vmul.f32 1.0, %v824
      %v826 = vrcp.pop %v805
      %v827 = vmul.f32 1.0, %v826
      %v828 = vrcp.pop %v806
      %v829 = vmul.f32 1.0, %v828
      %v830 = vrcp.pop %v807
      %v831 = vmul.f32 1.0, %v830
      %v832 = vrcp.pop %v808
      %v833 = vmul.f32 1.0, %v832
      %v834 = vrcp.pop %v809
      %v835 = vmul.f32 1.0, %v834
      %v836 = vrcp.pop %v810
      %v837 = vmul.f32 1.0, %v836
      %v838 = vrcp.pop %v811
      %v839 = vmul.f32 1.0, %v838
      %v840 = vrcp.pop %v812
      %v841 = vmul.f32 1.0, %v840
      %v842 = vrcp.pop %v813
      %v843 = vmul.f32 1.0, %v842
      %v844 = vrcp.pop %v814
      %v845 = vmul.f32 1.0, %v844
      %v846 = vrcp.pop %v815
      %v847 = vmul.f32 1.0, %v846
      %848 = vst [vmem:[%s229] sm:$0xff] %v817
      %849 = vst [vmem:[%s229 + $0x8] sm:$0xff] %v819
      %850 = vst [vmem:[%s229 + $0x10] sm:$0xff] %v821
      %851 = vst [vmem:[%s229 + $0x18] sm:$0xff] %v823
      %852 = vst [vmem:[%s229 + $0x20] sm:$0xff] %v825
      %853 = vst [vmem:[%s229 + $0x28] sm:$0xff] %v827
      %854 = vst [vmem:[%s229 + $0x30] sm:$0xff] %v829
      %855 = vst [vmem:[%s229 + $0x38] sm:$0xff] %v831
      %856 = vst [vmem:[%s229 + $0x40] sm:$0xff] %v833
      %857 = vst [vmem:[%s229 + $0x48] sm:$0xff] %v835
      %858 = vst [vmem:[%s229 + $0x50] sm:$0xff] %v837
      %859 = vst [vmem:[%s229 + $0x58] sm:$0xff] %v839
      %860 = vst [vmem:[%s229 + $0x60] sm:$0xff] %v841
      %861 = vst [vmem:[%s229 + $0x68] sm:$0xff] %v843
      %862 = vst [vmem:[%s229 + $0x70] sm:$0xff] %v845
      %863 = vst [vmem:[%s229 + $0x78] sm:$0xff] %v847
      %s864 = smul.u32 16, %s16
      %p865 = scmp.lt.s32.totalorder %s864, 31
      %s866 = scalar_select %p865, %s864, 31
      %s867 = smul.addr %s866, 8
      %s868 = scalar_lea.vmem %s5, %s867
      // Predicated region
      $region41: #{encoder_forward.1} parent=39 // pred_check
        %p869 = pneg %p144
      $region42: #{encoder_forward.1} parent=39 // pred_check_branch
        %871 = sbr.rel (%p869) target = $region44
      $region43: #{encoder_forward.1} parent=39 // pred_region
        %s872 = smul.u32 16, %s16
      $region44: #{encoder_forward.1} parent=39 // pred_fallthru
        _
    $region40: #{encoder_forward.1} parent=5 // pred_fallthru
      _
    %p873 = scmp.le.s32.totalorder 2, %s11
    // Predicated region
    $region45: #{encoder_forward.1} parent=5 // pred_check
      %p874 = pneg %p873
    $region46: #{encoder_forward.1} parent=5 // pred_check_branch
      %876 = sbr.rel (%p874) target = $region48
    $region47: #{encoder_forward.1} parent=5 // pred_region
      %s877 = ssub.s32 %s11, 2
      // Predicated region
      $region49: #{encoder_forward.1} parent=47 // pred_check
        %p878 = pneg %p150
      $region50: #{encoder_forward.1} parent=47 // pred_check_branch
        %880 = sbr.rel (%p878) target = $region52
      $region51: #{encoder_forward.1} parent=47 // pred_region
        %s881 = smul.u32 16, %s17
        %p882 = scmp.lt.s32.totalorder %s881, 31
        %s883 = scalar_select %p882, %s881, 31
        %s884 = smul.addr %s883, 8
        %s885 = scalar_lea.vmem %s5, %s884
      $region52: #{encoder_forward.1} parent=47 // pred_fallthru
        _
    $region48: #{encoder_forward.1} parent=5 // pred_fallthru
      _
  $region6: #{encoder_forward.1} parent=0 // loop_footer
    %s15 = sadd.s32 1, %s11
  $region7: #{encoder_forward.1} parent=0 // loop_footer_branch
    %10 = sbr.rel target = $region3
  $region8: #{encoder_forward.1} parent=0 // loop_exit
    _

</llo_original>
